<compile_context>
chip_gen: v7x
topology: tpu7x:2x2x1
jax: 0.10.0
libtpu: 0.0.40
codegen_flags: <defaults>
</compile_context>

<pallas_src>
import functools

import jax
import jax.numpy as jnp
from jax.experimental import pallas as pl
from jax.experimental.pallas import tpu as pltpu


def _fixed_conv_kernel(w_ref, b_ref, x_ref, o_ref, xpad_ref, *, k, p, H, W):
    """One grid step convolves TN planes.

    w_ref    : (k, k)       filter, SMEM (scalar-prefetched)
    b_ref    : (1,)         bias,   SMEM (scalar-prefetched)
    x_ref    : (H, W, TN)   input slab, VMEM (planes on the lane axis)
    o_ref    : (H, W, TN)   output slab, VMEM
    xpad_ref : (Hp, Wp, TN) f32 scratch used for in-VMEM zero padding
    """
    # In-kernel zero padding: avoids a padded second copy of the input in HBM.
    xpad_ref[...] = jnp.zeros_like(xpad_ref)
    xpad_ref[p:p + H, p:p + W, :] = x_ref[...].astype(jnp.float32)

    # Fully unrolled k*k shifted-window MAC on the VPU. Shifts touch only the
    # major (H) and sublane (W) axes; the lane axis (planes) stays fixed, so
    # every tap is a plain vector multiply-add on dense 128-lane vregs and the
    # output store is an unmasked, lane-dense vst.
    acc = jnp.full(o_ref.shape, b_ref[0], dtype=jnp.float32)
    for di in range(k):
        for dj in range(k):
            acc = acc + xpad_ref[di:di + H, dj:dj + W, :] * w_ref[di, dj]
    o_ref[...] = acc.astype(o_ref.dtype)


def _choose_lane_tile(N, H, W, padding, elem_bytes,
                      vmem_budget_bytes=20 * 1024 * 1024):
    """Pick TN = planes per grid block (the lane-axis tile).

    Targets MiB-scale, lane-dense (multiple-of-128) blocks that fit comfortably
    in scoped VMEM on every generation (we explicitly request 32 MiB and budget
    ~20 MiB, leaving headroom for v7x's smaller physical VMEM), and keeps at
    least two grid blocks when N is large so the "parallel" grid axis can shard
    across v7x's two TensorCores.
    """
    Hp, Wp = H + 2 * padding, W + 2 * padding
    # Per-plane VMEM footprint of one grid step: double-buffered input and
    # output blocks (auto pipeline) + the f32 zero-padded scratch plane.
    per_plane = 2 * H * W * elem_bytes + 2 * H * W * elem_bytes + Hp * Wp * 4
    max_tn = max(1, int(vmem_budget_bytes // per_plane))
    if N <= 128:
        # Tiny problems (like the unit test): one block covering the full lane
        # extent (block last dim == full array last dim satisfies the lane rule).
        return N
    tn = min(max_tn, (N + 1) // 2)        # allow >= 2 blocks (v7x megacore)
    tn = max(128, (tn // 128) * 128)      # lane-dense multiple of 128
    return min(tn, N)


def fixed_conv(x, weight, bias, *, kernel_size, padding, stride=1):
    """x: (B, C, H, W); weight: (k, k); bias: (1,). Returns (B, C, H, W)."""
    assert stride == 1, "FixedConv reshape-back requires stride == 1"
    # 'same' spatial output is required for the reshape back to (B, C, H, W)
    # to be valid (this is the configuration the PyTorch module supports).
    assert 2 * padding == kernel_size - 1, (
        "FixedConv requires 2*padding == kernel_size - 1 (same-size output)")

    B, C, H, W = x.shape
    N = B * C
    p = padding
    Hp, Wp = H + 2 * p, W + 2 * p

    # Layout plumbing (wrapper-side transpose): planes on the minor/lane axis,
    # spatial dims on major/sublane axes -> lane-dense vregs for any H, W.
    x_hwn = jnp.transpose(x.reshape(N, H, W), (1, 2, 0))  # (H, W, N)

    TN = _choose_lane_tile(N, H, W, p, x.dtype.itemsize)
    grid = (pl.cdiv(N, TN),)

    kernel = functools.partial(_fixed_conv_kernel, k=kernel_size, p=p, H=H, W=W)

    out_hwn = pl.pallas_call(
        kernel,
        out_shape=jax.ShapeDtypeStruct((H, W, N), x.dtype),
        grid_spec=pltpu.PrefetchScalarGridSpec(
            # weight + bias are placed in SMEM once before the grid runs.
            num_scalar_prefetch=2,
            grid=grid,
            in_specs=[
                pl.BlockSpec((H, W, TN), lambda n, w, b: (0, 0, n)),
            ],
            out_specs=pl.BlockSpec((H, W, TN), lambda n, w, b: (0, 0, n)),
            scratch_shapes=[pltpu.VMEM((Hp, Wp, TN), jnp.float32)],
        ),
        compiler_params=pltpu.CompilerParams(
            dimension_semantics=("parallel",),   # N-axis shards across TCs on v7x
            vmem_limit_bytes=32 * 1024 * 1024,   # explicit; raises v5e's 16 MiB default
        ),
    )(weight.astype(jnp.float32), bias.astype(jnp.float32), x_hwn)

    return jnp.transpose(out_hwn, (2, 0, 1)).reshape(B, C, H, W)


def _reference(x, weight, bias, padding):
    """Pure-JAX reference (lax conv) for the correctness check."""
    B, C, H, W = x.shape
    xr = x.reshape(B * C, 1, H, W).astype(jnp.float32)
    w = weight.reshape(1, 1, *weight.shape).astype(jnp.float32)
    y = jax.lax.conv_general_dilated(
        xr, w, window_strides=(1, 1),
        padding=((padding, padding), (padding, padding)),
        dimension_numbers=("NCHW", "OIHW", "NCHW"),
    ) + bias[0]
    return y.reshape(B, C, H, W).astype(x.dtype)


if __name__ == "__main__":
    # Module hyper-params (odd kernel + "same" padding, as the module requires
    # for the reshape-back to be valid).
    kernel_size, padding, stride = 3, 1, 1

    key = jax.random.PRNGKey(0)
    kx, kw, kb = jax.random.split(key, 3)

    # Input (B, C, H, W).
    x = jax.random.normal(kx, (2, 4, 16, 16), dtype=jnp.float32)

    # Deterministic synthetic parameters (Conv2d(1,1,k) -> weight (k,k), bias (1,)).
    weight = jax.random.normal(kw, (kernel_size, kernel_size), dtype=jnp.float32) * 0.1
    bias = jax.random.normal(kb, (1,), dtype=jnp.float32) * 0.1

    f = jax.jit(functools.partial(fixed_conv, kernel_size=kernel_size,
                                  padding=padding, stride=stride))
    y = jax.block_until_ready(f(x, weight, bias))

    y_ref = _reference(x, weight, bias, padding)
    assert y.shape == x.shape
    assert jnp.allclose(y, y_ref, atol=1e-5, rtol=1e-5), "mismatch vs lax.conv reference"

    print("KERNEL_OK")
</pallas_src>

<mosaic_0001>
module attributes {stable_mosaic.version = 11 : i64} {
  func.func @_fixed_conv_kernel(%arg0: i32, %arg1: memref<3x3xf32, #tpu.memory_space<smem>>, %arg2: memref<1xf32, #tpu.memory_space<smem>>, %arg3: memref<16x16x8xf32, #tpu.memory_space<vmem>>, %arg4: memref<16x16x8xf32, #tpu.memory_space<vmem>>, %arg5: memref<18x18x8xf32, #tpu.memory_space<vmem>>) attributes {dimension_semantics = [#tpu.dimension_semantics<parallel>], iteration_bounds = array<i64: 1>, scalar_prefetch = 2 : i64, scratch_operands = 1 : i64, tpu.core_type = #tpu.core_type<tc>, window_params = [{transform_indices = @transform_0, window_bounds = array<i64: 16, 16, 8>}, {transform_indices = @transform_1, window_bounds = array<i64: 16, 16, 8>}]} {
    %cst = arith.constant 0.000000e+00 : f32
    %0 = vector.broadcast %cst : f32 to vector<18x18x8xf32>
    %c0 = arith.constant 0 : index
    %c0_0 = arith.constant 0 : index
    %c0_1 = arith.constant 0 : index
    %1 = vector.load %arg5[%c0, %c0_0, %c0_1] : memref<18x18x8xf32, #tpu.memory_space<vmem>>, vector<18x18x8xf32>
    tpu.vector_store %arg5[%c0, %c0_0, %c0_1], %0 {strides = array<i32>} : memref<18x18x8xf32, #tpu.memory_space<vmem>>, vector<18x18x8xf32>,
    %c0_2 = arith.constant 0 : index
    %c0_3 = arith.constant 0 : index
    %c0_4 = arith.constant 0 : index
    %2 = vector.load %arg3[%c0_2, %c0_3, %c0_4] : memref<16x16x8xf32, #tpu.memory_space<vmem>>, vector<16x16x8xf32>
    %c1 = arith.constant 1 : index
    %c1_5 = arith.constant 1 : index
    %c0_6 = arith.constant 0 : index
    %3 = vector.load %arg5[%c1, %c1_5, %c0_6] : memref<18x18x8xf32, #tpu.memory_space<vmem>>, vector<16x16x8xf32>
    tpu.vector_store %arg5[%c1, %c1_5, %c0_6], %2 {strides = array<i32>} : memref<18x18x8xf32, #tpu.memory_space<vmem>>, vector<16x16x8xf32>,
    %c0_7 = arith.constant 0 : index
    %4 = memref.load %arg2[%c0_7] : memref<1xf32, #tpu.memory_space<smem>>
    %5 = vector.broadcast %4 : f32 to vector<16x16x8xf32>
    %c0_8 = arith.constant 0 : index
    %c0_9 = arith.constant 0 : index
    %c0_10 = arith.constant 0 : index
    %6 = vector.load %arg5[%c0_8, %c0_9, %c0_10] : memref<18x18x8xf32, #tpu.memory_space<vmem>>, vector<16x16x8xf32>
    %c0_11 = arith.constant 0 : index
    %c0_12 = arith.constant 0 : index
    %7 = memref.load %arg1[%c0_11, %c0_12] : memref<3x3xf32, #tpu.memory_space<smem>>
    %8 = vector.broadcast %7 : f32 to vector<16x16x8xf32>
    %9 = arith.mulf %6, %8 : vector<16x16x8xf32>
    %10 = arith.addf %5, %9 : vector<16x16x8xf32>
    %c0_13 = arith.constant 0 : index
    %c1_14 = arith.constant 1 : index
    %c0_15 = arith.constant 0 : index
    %11 = vector.load %arg5[%c0_13, %c1_14, %c0_15] : memref<18x18x8xf32, #tpu.memory_space<vmem>>, vector<16x16x8xf32>
    %c0_16 = arith.constant 0 : index
    %c1_17 = arith.constant 1 : index
    %12 = memref.load %arg1[%c0_16, %c1_17] : memref<3x3xf32, #tpu.memory_space<smem>>
    %13 = vector.broadcast %12 : f32 to vector<16x16x8xf32>
    %14 = arith.mulf %11, %13 : vector<16x16x8xf32>
    %15 = arith.addf %10, %14 : vector<16x16x8xf32>
    %c0_18 = arith.constant 0 : index
    %c2 = arith.constant 2 : index
    %c0_19 = arith.constant 0 : index
    %16 = vector.load %arg5[%c0_18, %c2, %c0_19] : memref<18x18x8xf32, #tpu.memory_space<vmem>>, vector<16x16x8xf32>
    %c0_20 = arith.constant 0 : index
    %c2_21 = arith.constant 2 : index
    %17 = memref.load %arg1[%c0_20, %c2_21] : memref<3x3xf32, #tpu.memory_space<smem>>
    %18 = vector.broadcast %17 : f32 to vector<16x16x8xf32>
    %19 = arith.mulf %16, %18 : vector<16x16x8xf32>
    %20 = arith.addf %15, %19 : vector<16x16x8xf32>
    %c1_22 = arith.constant 1 : index
    %c0_23 = arith.constant 0 : index
    %c0_24 = arith.constant 0 : index
    %21 = vector.load %arg5[%c1_22, %c0_23, %c0_24] : memref<18x18x8xf32, #tpu.memory_space<vmem>>, vector<16x16x8xf32>
    %c1_25 = arith.constant 1 : index
    %c0_26 = arith.constant 0 : index
    %22 = memref.load %arg1[%c1_25, %c0_26] : memref<3x3xf32, #tpu.memory_space<smem>>
    %23 = vector.broadcast %22 : f32 to vector<16x16x8xf32>
    %24 = arith.mulf %21, %23 : vector<16x16x8xf32>
    %25 = arith.addf %20, %24 : vector<16x16x8xf32>
    %c1_27 = arith.constant 1 : index
    %c1_28 = arith.constant 1 : index
    %c0_29 = arith.constant 0 : index
    %26 = vector.load %arg5[%c1_27, %c1_28, %c0_29] : memref<18x18x8xf32, #tpu.memory_space<vmem>>, vector<16x16x8xf32>
    %c1_30 = arith.constant 1 : index
    %c1_31 = arith.constant 1 : index
    %27 = memref.load %arg1[%c1_30, %c1_31] : memref<3x3xf32, #tpu.memory_space<smem>>
    %28 = vector.broadcast %27 : f32 to vector<16x16x8xf32>
    %29 = arith.mulf %26, %28 : vector<16x16x8xf32>
    %30 = arith.addf %25, %29 : vector<16x16x8xf32>
    %c1_32 = arith.constant 1 : index
    %c2_33 = arith.constant 2 : index
    %c0_34 = arith.constant 0 : index
    %31 = vector.load %arg5[%c1_32, %c2_33, %c0_34] : memref<18x18x8xf32, #tpu.memory_space<vmem>>, vector<16x16x8xf32>
    %c1_35 = arith.constant 1 : index
    %c2_36 = arith.constant 2 : index
    %32 = memref.load %arg1[%c1_35, %c2_36] : memref<3x3xf32, #tpu.memory_space<smem>>
    %33 = vector.broadcast %32 : f32 to vector<16x16x8xf32>
    %34 = arith.mulf %31, %33 : vector<16x16x8xf32>
    %35 = arith.addf %30, %34 : vector<16x16x8xf32>
    %c2_37 = arith.constant 2 : index
    %c0_38 = arith.constant 0 : index
    %c0_39 = arith.constant 0 : index
    %36 = vector.load %arg5[%c2_37, %c0_38, %c0_39] : memref<18x18x8xf32, #tpu.memory_space<vmem>>, vector<16x16x8xf32>
    %c2_40 = arith.constant 2 : index
    %c0_41 = arith.constant 0 : index
    %37 = memref.load %arg1[%c2_40, %c0_41] : memref<3x3xf32, #tpu.memory_space<smem>>
    %38 = vector.broadcast %37 : f32 to vector<16x16x8xf32>
    %39 = arith.mulf %36, %38 : vector<16x16x8xf32>
    %40 = arith.addf %35, %39 : vector<16x16x8xf32>
    %c2_42 = arith.constant 2 : index
    %c1_43 = arith.constant 1 : index
    %c0_44 = arith.constant 0 : index
    %41 = vector.load %arg5[%c2_42, %c1_43, %c0_44] : memref<18x18x8xf32, #tpu.memory_space<vmem>>, vector<16x16x8xf32>
    %c2_45 = arith.constant 2 : index
    %c1_46 = arith.constant 1 : index
    %42 = memref.load %arg1[%c2_45, %c1_46] : memref<3x3xf32, #tpu.memory_space<smem>>
    %43 = vector.broadcast %42 : f32 to vector<16x16x8xf32>
    %44 = arith.mulf %41, %43 : vector<16x16x8xf32>
    %45 = arith.addf %40, %44 : vector<16x16x8xf32>
    %c2_47 = arith.constant 2 : index
    %c2_48 = arith.constant 2 : index
    %c0_49 = arith.constant 0 : index
    %46 = vector.load %arg5[%c2_47, %c2_48, %c0_49] : memref<18x18x8xf32, #tpu.memory_space<vmem>>, vector<16x16x8xf32>
    %c2_50 = arith.constant 2 : index
    %c2_51 = arith.constant 2 : index
    %47 = memref.load %arg1[%c2_50, %c2_51] : memref<3x3xf32, #tpu.memory_space<smem>>
    %48 = vector.broadcast %47 : f32 to vector<16x16x8xf32>
    %49 = arith.mulf %46, %48 : vector<16x16x8xf32>
    %50 = arith.addf %45, %49 : vector<16x16x8xf32>
    %c0_52 = arith.constant 0 : index
    %c0_53 = arith.constant 0 : index
    %c0_54 = arith.constant 0 : index
    %51 = vector.load %arg4[%c0_52, %c0_53, %c0_54] : memref<16x16x8xf32, #tpu.memory_space<vmem>>, vector<16x16x8xf32>
    tpu.vector_store %arg4[%c0_52, %c0_53, %c0_54], %50 {strides = array<i32>} : memref<16x16x8xf32, #tpu.memory_space<vmem>>, vector<16x16x8xf32>,
    return
  }
  func.func @transform_0(%arg0: i32, %arg1: memref<3x3xf32, #tpu.memory_space<smem>>, %arg2: memref<1xf32, #tpu.memory_space<smem>>) -> (i32, i32, i32) {
    %c0_i32 = arith.constant 0 : i32
    %c0_i32_0 = arith.constant 0 : i32
    %c0_i32_1 = arith.constant 0 : i32
    return %c0_i32, %c0_i32_0, %arg0 : i32, i32, i32
  }
  func.func @transform_1(%arg0: i32, %arg1: memref<3x3xf32, #tpu.memory_space<smem>>, %arg2: memref<1xf32, #tpu.memory_space<smem>>) -> (i32, i32, i32) {
    %c0_i32 = arith.constant 0 : i32
    %c0_i32_0 = arith.constant 0 : i32
    %c0_i32_1 = arith.constant 0 : i32
    return %c0_i32, %c0_i32_0, %arg0 : i32, i32, i32
  }
}

</mosaic_0001>

<llo_original>
// kernel: fixed_conv.1
$region0: #{fixed_conv.1}
  #allocation0 [shape = 'u32[]', space=smem, size = 0x4, offset = 0x4, fixed_abs, tag = 'smem constant byte address 0x4 - core index']
  #allocation1 [shape = 'u32[144,128]{1,0:T(1,128)}', space=vmem, size = 0x12000, scoped, tag = 'internal scratch']
  #allocation2 [shape = 'f32[18,18,8]{2,1,0:T(8,128)}', space=vmem, size = 0x36000, scoped, tag = 'scratch operand']
  #allocation3 [shape = 's32[1]{0}', space=sflag, size = 0x4, scoped, tag = 'scoped memory for fixed_conv.1']
  #allocation4 [shape = 'u8[2048]{0}', space=smem, size = 0x800, scoped, tag = 'prefetched SMEM operand 0']
  #allocation5 [shape = 'f32[1]{0:T(128)S(6)}', space=smem, size = 0x200, scoped, tag = 'prefetched SMEM operand 1']
  %s0 = inlined_call_operand.vmem [shape: f32[3,3], index: 0, kind: input, shape index: {}]
  %s1 = inlined_call_operand.<no memory space> [shape: f32[1], index: 1, kind: input, shape index: {}]
  %s2 = inlined_call_operand.vmem [shape: f32[16,16,8], index: 2, kind: input, shape index: {}]
  %s3 = inlined_call_operand.vmem [shape: f32[16,16,8], index: 3, kind: output, shape index: {}]
  %s4 = sld [smem:[#allocation0]]
  $region14: #{fixed_conv.1} parent=0
    _
  %s6 = ssub.s32 1, %s4
  %s7 = scalar_select 0, %s6, %s4
  %s8 = sshll.u32 %s0, 4
  %s9 = int_to_ptr.vmem [resolvable:$true] %s8
  %11 = dma.vmem_to_smem %s9, 64, [#allocation4], [#allocation3]
  %12 = sst [smem:[#allocation5]] %s1
  %13 = dma.done [#allocation3], 64
  %14 = sfence
  // Predicated region
  $region2: #{fixed_conv.1} parent=0 // pred_check
    _
  $region3: #{fixed_conv.1} parent=0 // pred_check_branch
    %16 = sbr.rel (0) target = $region5
  $region4: #{fixed_conv.1} parent=0 // pred_region
    _
  $region5: #{fixed_conv.1} parent=0 // pred_fallthru
    _
  %vm17 = vcmask 64512
  %18 = vst.msk [vmem:[#allocation2] sm:$0xff] %vm17, 0.0
  %19 = vst.msk [vmem:[#allocation2 + $0x8] sm:$0xff] %vm17, 0.0
  %vm20 = vcmask 58368
  %21 = vst.msk [vmem:[#allocation2 + $0x10] sm:$0x3] %vm20, 0.0
  %22 = vst.msk [vmem:[#allocation2 + $0x18] sm:$0xff] %vm17, 0.0
  %23 = vst.msk [vmem:[#allocation2 + $0x20] sm:$0xff] %vm17, 0.0
  %24 = vst.msk [vmem:[#allocation2 + $0x28] sm:$0x3] %vm20, 0.0
  %25 = vst.msk [vmem:[#allocation2 + $0x30] sm:$0xff] %vm17, 0.0
  %26 = vst.msk [vmem:[#allocation2 + $0x38] sm:$0xff] %vm17, 0.0
  %27 = vst.msk [vmem:[#allocation2 + $0x40] sm:$0x3] %vm20, 0.0
  %28 = vst.msk [vmem:[#allocation2 + $0x48] sm:$0xff] %vm17, 0.0
  %29 = vst.msk [vmem:[#allocation2 + $0x50] sm:$0xff] %vm17, 0.0
  %30 = vst.msk [vmem:[#allocation2 + $0x58] sm:$0x3] %vm20, 0.0
  %31 = vst.msk [vmem:[#allocation2 + $0x60] sm:$0xff] %vm17, 0.0
  %32 = vst.msk [vmem:[#allocation2 + $0x68] sm:$0xff] %vm17, 0.0
  %33 = vst.msk [vmem:[#allocation2 + $0x70] sm:$0x3] %vm20, 0.0
  %34 = vst.msk [vmem:[#allocation2 + $0x78] sm:$0xff] %vm17, 0.0
  %35 = vst.msk [vmem:[#allocation2 + $0x80] sm:$0xff] %vm17, 0.0
  %36 = vst.msk [vmem:[#allocation2 + $0x88] sm:$0x3] %vm20, 0.0
  %37 = vst.msk [vmem:[#allocation2 + $0x90] sm:$0xff] %vm17, 0.0
  %38 = vst.msk [vmem:[#allocation2 + $0x98] sm:$0xff] %vm17, 0.0
  %39 = vst.msk [vmem:[#allocation2 + $0xa0] sm:$0x3] %vm20, 0.0
  %40 = vst.msk [vmem:[#allocation2 + $0xa8] sm:$0xff] %vm17, 0.0
  %41 = vst.msk [vmem:[#allocation2 + $0xb0] sm:$0xff] %vm17, 0.0
  %42 = vst.msk [vmem:[#allocation2 + $0xb8] sm:$0x3] %vm20, 0.0
  %43 = vst.msk [vmem:[#allocation2 + $0xc0] sm:$0xff] %vm17, 0.0
  %44 = vst.msk [vmem:[#allocation2 + $0xc8] sm:$0xff] %vm17, 0.0
  %45 = vst.msk [vmem:[#allocation2 + $0xd0] sm:$0x3] %vm20, 0.0
  %46 = vst.msk [vmem:[#allocation2 + $0xd8] sm:$0xff] %vm17, 0.0
  %47 = vst.msk [vmem:[#allocation2 + $0xe0] sm:$0xff] %vm17, 0.0
  %48 = vst.msk [vmem:[#allocation2 + $0xe8] sm:$0x3] %vm20, 0.0
  %49 = vst.msk [vmem:[#allocation2 + $0xf0] sm:$0xff] %vm17, 0.0
  %50 = vst.msk [vmem:[#allocation2 + $0xf8] sm:$0xff] %vm17, 0.0
  %51 = vst.msk [vmem:[#allocation2 + $0x100] sm:$0x3] %vm20, 0.0
  %52 = vst.msk [vmem:[#allocation2 + $0x108] sm:$0xff] %vm17, 0.0
  %53 = vst.msk [vmem:[#allocation2 + $0x110] sm:$0xff] %vm17, 0.0
  %54 = vst.msk [vmem:[#allocation2 + $0x118] sm:$0x3] %vm20, 0.0
  %55 = vst.msk [vmem:[#allocation2 + $0x120] sm:$0xff] %vm17, 0.0
  %56 = vst.msk [vmem:[#allocation2 + $0x128] sm:$0xff] %vm17, 0.0
  %57 = vst.msk [vmem:[#allocation2 + $0x130] sm:$0x3] %vm20, 0.0
  %58 = vst.msk [vmem:[#allocation2 + $0x138] sm:$0xff] %vm17, 0.0
  %59 = vst.msk [vmem:[#allocation2 + $0x140] sm:$0xff] %vm17, 0.0
  %60 = vst.msk [vmem:[#allocation2 + $0x148] sm:$0x3] %vm20, 0.0
  %61 = vst.msk [vmem:[#allocation2 + $0x150] sm:$0xff] %vm17, 0.0
  %62 = vst.msk [vmem:[#allocation2 + $0x158] sm:$0xff] %vm17, 0.0
  %63 = vst.msk [vmem:[#allocation2 + $0x160] sm:$0x3] %vm20, 0.0
  %64 = vst.msk [vmem:[#allocation2 + $0x168] sm:$0xff] %vm17, 0.0
  %65 = vst.msk [vmem:[#allocation2 + $0x170] sm:$0xff] %vm17, 0.0
  %66 = vst.msk [vmem:[#allocation2 + $0x178] sm:$0x3] %vm20, 0.0
  %67 = vst.msk [vmem:[#allocation2 + $0x180] sm:$0xff] %vm17, 0.0
  %68 = vst.msk [vmem:[#allocation2 + $0x188] sm:$0xff] %vm17, 0.0
  %69 = vst.msk [vmem:[#allocation2 + $0x190] sm:$0x3] %vm20, 0.0
  %70 = vst.msk [vmem:[#allocation2 + $0x198] sm:$0xff] %vm17, 0.0
  %71 = vst.msk [vmem:[#allocation2 + $0x1a0] sm:$0xff] %vm17, 0.0
  %72 = vst.msk [vmem:[#allocation2 + $0x1a8] sm:$0x3] %vm20, 0.0
  %v73 = vld [vmem:[%s2] sm:$0xff]
  %v74 = vld [vmem:[%s2 + $0x8] sm:$0xff]
  %v75 = vld [vmem:[%s2 + $0x10] sm:$0xff]
  %v76 = vld [vmem:[%s2 + $0x18] sm:$0xff]
  %v77 = vld [vmem:[%s2 + $0x20] sm:$0xff]
  %v78 = vld [vmem:[%s2 + $0x28] sm:$0xff]
  %v79 = vld [vmem:[%s2 + $0x30] sm:$0xff]
  %v80 = vld [vmem:[%s2 + $0x38] sm:$0xff]
  %v81 = vld [vmem:[%s2 + $0x40] sm:$0xff]
  %v82 = vld [vmem:[%s2 + $0x48] sm:$0xff]
  %v83 = vld [vmem:[%s2 + $0x50] sm:$0xff]
  %v84 = vld [vmem:[%s2 + $0x58] sm:$0xff]
  %v85 = vld [vmem:[%s2 + $0x60] sm:$0xff]
  %v86 = vld [vmem:[%s2 + $0x68] sm:$0xff]
  %v87 = vld [vmem:[%s2 + $0x70] sm:$0xff]
  %v88 = vld [vmem:[%s2 + $0x78] sm:$0xff]
  %v89 = vld [vmem:[%s2 + $0x80] sm:$0xff]
  %v90 = vld [vmem:[%s2 + $0x88] sm:$0xff]
  %v91 = vld [vmem:[%s2 + $0x90] sm:$0xff]
  %v92 = vld [vmem:[%s2 + $0x98] sm:$0xff]
  %v93 = vld [vmem:[%s2 + $0xa0] sm:$0xff]
  %v94 = vld [vmem:[%s2 + $0xa8] sm:$0xff]
  %v95 = vld [vmem:[%s2 + $0xb0] sm:$0xff]
  %v96 = vld [vmem:[%s2 + $0xb8] sm:$0xff]
  %v97 = vld [vmem:[%s2 + $0xc0] sm:$0xff]
  %v98 = vld [vmem:[%s2 + $0xc8] sm:$0xff]
  %v99 = vld [vmem:[%s2 + $0xd0] sm:$0xff]
  %v100 = vld [vmem:[%s2 + $0xd8] sm:$0xff]
  %v101 = vld [vmem:[%s2 + $0xe0] sm:$0xff]
  %v102 = vld [vmem:[%s2 + $0xe8] sm:$0xff]
  %v103 = vld [vmem:[%s2 + $0xf0] sm:$0xff]
  %v104 = vld [vmem:[%s2 + $0xf8] sm:$0xff]
  %s105 = scalar_lea.vmem [#allocation2], 24
  %106 = vst.msk [vmem:[%s105 + $0x1] sm:$0xff] %vm17, %v73
  %107 = vst.msk [vmem:[%s105 + $0x9] sm:$0xff] %vm17, %v74
  %108 = vst.msk [vmem:[%s105 + $0x19] sm:$0xff] %vm17, %v75
  %109 = vst.msk [vmem:[%s105 + $0x21] sm:$0xff] %vm17, %v76
  %110 = vst.msk [vmem:[%s105 + $0x31] sm:$0xff] %vm17, %v77
  %111 = vst.msk [vmem:[%s105 + $0x39] sm:$0xff] %vm17, %v78
  %112 = vst.msk [vmem:[%s105 + $0x49] sm:$0xff] %vm17, %v79
  %113 = vst.msk [vmem:[%s105 + $0x51] sm:$0xff] %vm17, %v80
  %114 = vst.msk [vmem:[%s105 + $0x61] sm:$0xff] %vm17, %v81
  %115 = vst.msk [vmem:[%s105 + $0x69] sm:$0xff] %vm17, %v82
  %116 = vst.msk [vmem:[%s105 + $0x79] sm:$0xff] %vm17, %v83
  %117 = vst.msk [vmem:[%s105 + $0x81] sm:$0xff] %vm17, %v84
  %118 = vst.msk [vmem:[%s105 + $0x91] sm:$0xff] %vm17, %v85
  %119 = vst.msk [vmem:[%s105 + $0x99] sm:$0xff] %vm17, %v86
  %120 = vst.msk [vmem:[%s105 + $0xa9] sm:$0xff] %vm17, %v87
  %121 = vst.msk [vmem:[%s105 + $0xb1] sm:$0xff] %vm17, %v88
  %122 = vst.msk [vmem:[%s105 + $0xc1] sm:$0xff] %vm17, %v89
  %123 = vst.msk [vmem:[%s105 + $0xc9] sm:$0xff] %vm17, %v90
  %124 = vst.msk [vmem:[%s105 + $0xd9] sm:$0xff] %vm17, %v91
  %125 = vst.msk [vmem:[%s105 + $0xe1] sm:$0xff] %vm17, %v92
  %126 = vst.msk [vmem:[%s105 + $0xf1] sm:$0xff] %vm17, %v93
  %127 = vst.msk [vmem:[%s105 + $0xf9] sm:$0xff] %vm17, %v94
  %128 = vst.msk [vmem:[%s105 + $0x109] sm:$0xff] %vm17, %v95
  %129 = vst.msk [vmem:[%s105 + $0x111] sm:$0xff] %vm17, %v96
  %130 = vst.msk [vmem:[%s105 + $0x121] sm:$0xff] %vm17, %v97
  %131 = vst.msk [vmem:[%s105 + $0x129] sm:$0xff] %vm17, %v98
  %132 = vst.msk [vmem:[%s105 + $0x139] sm:$0xff] %vm17, %v99
  %133 = vst.msk [vmem:[%s105 + $0x141] sm:$0xff] %vm17, %v100
  %134 = vst.msk [vmem:[%s105 + $0x151] sm:$0xff] %vm17, %v101
  %135 = vst.msk [vmem:[%s105 + $0x159] sm:$0xff] %vm17, %v102
  %136 = vst.msk [vmem:[%s105 + $0x169] sm:$0xff] %vm17, %v103
  %137 = vst.msk [vmem:[%s105 + $0x171] sm:$0xff] %vm17, %v104
  %s138 = sld [smem:[#allocation5]]
  %v139 = vstv %s138
  %v140 = vld [vmem:[#allocation2] sm:$0xff]
  %v141 = vld [vmem:[#allocation2 + $0x8] sm:$0xff]
  %v142 = vld [vmem:[#allocation2 + $0x18] sm:$0xff]
  %v143 = vld [vmem:[#allocation2 + $0x20] sm:$0xff]
  %v144 = vld [vmem:[#allocation2 + $0x30] sm:$0xff]
  %v145 = vld [vmem:[#allocation2 + $0x38] sm:$0xff]
  %v146 = vld [vmem:[#allocation2 + $0x48] sm:$0xff]
  %v147 = vld [vmem:[#allocation2 + $0x50] sm:$0xff]
  %v148 = vld [vmem:[#allocation2 + $0x60] sm:$0xff]
  %v149 = vld [vmem:[#allocation2 + $0x68] sm:$0xff]
  %v150 = vld [vmem:[#allocation2 + $0x78] sm:$0xff]
  %v151 = vld [vmem:[#allocation2 + $0x80] sm:$0xff]
  %v152 = vld [vmem:[#allocation2 + $0x90] sm:$0xff]
  %v153 = vld [vmem:[#allocation2 + $0x98] sm:$0xff]
  %v154 = vld [vmem:[#allocation2 + $0xa8] sm:$0xff]
  %v155 = vld [vmem:[#allocation2 + $0xb0] sm:$0xff]
  %v156 = vld [vmem:[#allocation2 + $0xc0] sm:$0xff]
  %v157 = vld [vmem:[#allocation2 + $0xc8] sm:$0xff]
  %v158 = vld [vmem:[#allocation2 + $0xd8] sm:$0xff]
  %v159 = vld [vmem:[#allocation2 + $0xe0] sm:$0xff]
  %v160 = vld [vmem:[#allocation2 + $0xf0] sm:$0xff]
  %v161 = vld [vmem:[#allocation2 + $0xf8] sm:$0xff]
  %v162 = vld [vmem:[#allocation2 + $0x108] sm:$0xff]
  %v163 = vld [vmem:[#allocation2 + $0x110] sm:$0xff]
  %v164 = vld [vmem:[#allocation2 + $0x120] sm:$0xff]
  %v165 = vld [vmem:[#allocation2 + $0x128] sm:$0xff]
  %v166 = vld [vmem:[#allocation2 + $0x138] sm:$0xff]
  %v167 = vld [vmem:[#allocation2 + $0x140] sm:$0xff]
  %v168 = vld [vmem:[#allocation2 + $0x150] sm:$0xff]
  %v169 = vld [vmem:[#allocation2 + $0x158] sm:$0xff]
  %v170 = vld [vmem:[#allocation2 + $0x168] sm:$0xff]
  %v171 = vld [vmem:[#allocation2 + $0x170] sm:$0xff]
  %s172 = sld [smem:[#allocation4]]
  %v173 = vstv %s172
  %v174 = vmul.f32 %v140, %v173
  %v175 = vmul.f32 %v141, %v173
  %v176 = vmul.f32 %v142, %v173
  %v177 = vmul.f32 %v143, %v173
  %v178 = vmul.f32 %v144, %v173
  %v179 = vmul.f32 %v145, %v173
  %v180 = vmul.f32 %v146, %v173
  %v181 = vmul.f32 %v147, %v173
  %v182 = vmul.f32 %v148, %v173
  %v183 = vmul.f32 %v149, %v173
  %v184 = vmul.f32 %v150, %v173
  %v185 = vmul.f32 %v151, %v173
  %v186 = vmul.f32 %v152, %v173
  %v187 = vmul.f32 %v153, %v173
  %v188 = vmul.f32 %v154, %v173
  %v189 = vmul.f32 %v155, %v173
  %v190 = vmul.f32 %v156, %v173
  %v191 = vmul.f32 %v157, %v173
  %v192 = vmul.f32 %v158, %v173
  %v193 = vmul.f32 %v159, %v173
  %v194 = vmul.f32 %v160, %v173
  %v195 = vmul.f32 %v161, %v173
  %v196 = vmul.f32 %v162, %v173
  %v197 = vmul.f32 %v163, %v173
  %v198 = vmul.f32 %v164, %v173
  %v199 = vmul.f32 %v165, %v173
  %v200 = vmul.f32 %v166, %v173
  %v201 = vmul.f32 %v167, %v173
  %v202 = vmul.f32 %v168, %v173
  %v203 = vmul.f32 %v169, %v173
  %v204 = vmul.f32 %v170, %v173
  %v205 = vmul.f32 %v171, %v173
  %v206 = vadd.f32 %v139, %v174
  %v207 = vadd.f32 %v139, %v175
  %v208 = vadd.f32 %v139, %v176
  %v209 = vadd.f32 %v139, %v177
  %v210 = vadd.f32 %v139, %v178
  %v211 = vadd.f32 %v139, %v179
  %v212 = vadd.f32 %v139, %v180
  %v213 = vadd.f32 %v139, %v181
  %v214 = vadd.f32 %v139, %v182
  %v215 = vadd.f32 %v139, %v183
  %v216 = vadd.f32 %v139, %v184
  %v217 = vadd.f32 %v139, %v185
  %v218 = vadd.f32 %v139, %v186
  %v219 = vadd.f32 %v139, %v187
  %v220 = vadd.f32 %v139, %v188
  %v221 = vadd.f32 %v139, %v189
  %v222 = vadd.f32 %v139, %v190
  %v223 = vadd.f32 %v139, %v191
  %v224 = vadd.f32 %v139, %v192
  %v225 = vadd.f32 %v139, %v193
  %v226 = vadd.f32 %v139, %v194
  %v227 = vadd.f32 %v139, %v195
  %v228 = vadd.f32 %v139, %v196
  %v229 = vadd.f32 %v139, %v197
  %v230 = vadd.f32 %v139, %v198
  %v231 = vadd.f32 %v139, %v199
  %v232 = vadd.f32 %v139, %v200
  %v233 = vadd.f32 %v139, %v201
  %v234 = vadd.f32 %v139, %v202
  %v235 = vadd.f32 %v139, %v203
  %v236 = vadd.f32 %v139, %v204
  %v237 = vadd.f32 %v139, %v205
  %v238 = vld [vmem:[#allocation2 + $0x1] sm:$0xff]
  %v239 = vld [vmem:[#allocation2 + $0x9] sm:$0xff]
  %v240 = vld [vmem:[#allocation2 + $0x19] sm:$0xff]
  %v241 = vld [vmem:[#allocation2 + $0x21] sm:$0xff]
  %v242 = vld [vmem:[#allocation2 + $0x31] sm:$0xff]
  %v243 = vld [vmem:[#allocation2 + $0x39] sm:$0xff]
  %v244 = vld [vmem:[#allocation2 + $0x49] sm:$0xff]
  %v245 = vld [vmem:[#allocation2 + $0x51] sm:$0xff]
  %v246 = vld [vmem:[#allocation2 + $0x61] sm:$0xff]
  %v247 = vld [vmem:[#allocation2 + $0x69] sm:$0xff]
  %v248 = vld [vmem:[#allocation2 + $0x79] sm:$0xff]
  %v249 = vld [vmem:[#allocation2 + $0x81] sm:$0xff]
  %v250 = vld [vmem:[#allocation2 + $0x91] sm:$0xff]
  %v251 = vld [vmem:[#allocation2 + $0x99] sm:$0xff]
  %v252 = vld [vmem:[#allocation2 + $0xa9] sm:$0xff]
  %v253 = vld [vmem:[#allocation2 + $0xb1] sm:$0xff]
  %v254 = vld [vmem:[#allocation2 + $0xc1] sm:$0xff]
  %v255 = vld [vmem:[#allocation2 + $0xc9] sm:$0xff]
  %v256 = vld [vmem:[#allocation2 + $0xd9] sm:$0xff]
  %v257 = vld [vmem:[#allocation2 + $0xe1] sm:$0xff]
  %v258 = vld [vmem:[#allocation2 + $0xf1] sm:$0xff]
  %v259 = vld [vmem:[#allocation2 + $0xf9] sm:$0xff]
  %v260 = vld [vmem:[#allocation2 + $0x109] sm:$0xff]
  %v261 = vld [vmem:[#allocation2 + $0x111] sm:$0xff]
  %v262 = vld [vmem:[#allocation2 + $0x121] sm:$0xff]
  %v263 = vld [vmem:[#allocation2 + $0x129] sm:$0xff]
  %v264 = vld [vmem:[#allocation2 + $0x139] sm:$0xff]
  %v265 = vld [vmem:[#allocation2 + $0x141] sm:$0xff]
  %v266 = vld [vmem:[#allocation2 + $0x151] sm:$0xff]
  %v267 = vld [vmem:[#allocation2 + $0x159] sm:$0xff]
  %v268 = vld [vmem:[#allocation2 + $0x169] sm:$0xff]
  %v269 = vld [vmem:[#allocation2 + $0x171] sm:$0xff]
  %s270 = sld [smem:[#allocation4 + $0x1]]
  %v271 = vstv %s270
  %v272 = vmul.f32 %v238, %v271
  %v273 = vmul.f32 %v239, %v271
  %v274 = vmul.f32 %v240, %v271
  %v275 = vmul.f32 %v241, %v271
  %v276 = vmul.f32 %v242, %v271
  %v277 = vmul.f32 %v243, %v271
  %v278 = vmul.f32 %v244, %v271
  %v279 = vmul.f32 %v245, %v271
  %v280 = vmul.f32 %v246, %v271
  %v281 = vmul.f32 %v247, %v271
  %v282 = vmul.f32 %v248, %v271
  %v283 = vmul.f32 %v249, %v271
  %v284 = vmul.f32 %v250, %v271
  %v285 = vmul.f32 %v251, %v271
  %v286 = vmul.f32 %v252, %v271
  %v287 = vmul.f32 %v253, %v271
  %v288 = vmul.f32 %v254, %v271
  %v289 = vmul.f32 %v255, %v271
  %v290 = vmul.f32 %v256, %v271
  %v291 = vmul.f32 %v257, %v271
  %v292 = vmul.f32 %v258, %v271
  %v293 = vmul.f32 %v259, %v271
  %v294 = vmul.f32 %v260, %v271
  %v295 = vmul.f32 %v261, %v271
  %v296 = vmul.f32 %v262, %v271
  %v297 = vmul.f32 %v263, %v271
  %v298 = vmul.f32 %v264, %v271
  %v299 = vmul.f32 %v265, %v271
  %v300 = vmul.f32 %v266, %v271
  %v301 = vmul.f32 %v267, %v271
  %v302 = vmul.f32 %v268, %v271
  %v303 = vmul.f32 %v269, %v271
  %v304 = vadd.f32 %v206, %v272
  %v305 = vadd.f32 %v207, %v273
  %v306 = vadd.f32 %v208, %v274
  %v307 = vadd.f32 %v209, %v275
  %v308 = vadd.f32 %v210, %v276
  %v309 = vadd.f32 %v211, %v277
  %v310 = vadd.f32 %v212, %v278
  %v311 = vadd.f32 %v213, %v279
  %v312 = vadd.f32 %v214, %v280
  %v313 = vadd.f32 %v215, %v281
  %v314 = vadd.f32 %v216, %v282
  %v315 = vadd.f32 %v217, %v283
  %v316 = vadd.f32 %v218, %v284
  %v317 = vadd.f32 %v219, %v285
  %v318 = vadd.f32 %v220, %v286
  %v319 = vadd.f32 %v221, %v287
  %v320 = vadd.f32 %v222, %v288
  %v321 = vadd.f32 %v223, %v289
  %v322 = vadd.f32 %v224, %v290
  %v323 = vadd.f32 %v225, %v291
  %v324 = vadd.f32 %v226, %v292
  %v325 = vadd.f32 %v227, %v293
  %v326 = vadd.f32 %v228, %v294
  %v327 = vadd.f32 %v229, %v295
  %v328 = vadd.f32 %v230, %v296
  %v329 = vadd.f32 %v231, %v297
  %v330 = vadd.f32 %v232, %v298
  %v331 = vadd.f32 %v233, %v299
  %v332 = vadd.f32 %v234, %v300
  %v333 = vadd.f32 %v235, %v301
  %v334 = vadd.f32 %v236, %v302
  %v335 = vadd.f32 %v237, %v303
  %v336 = vld [vmem:[#allocation2 + $0x2] sm:$0xff]
  %v337 = vld [vmem:[#allocation2 + $0xa] sm:$0xff]
  %v338 = vld [vmem:[#allocation2 + $0x1a] sm:$0xff]
  %v339 = vld [vmem:[#allocation2 + $0x22] sm:$0xff]
  %v340 = vld [vmem:[#allocation2 + $0x32] sm:$0xff]
  %v341 = vld [vmem:[#allocation2 + $0x3a] sm:$0xff]
  %v342 = vld [vmem:[#allocation2 + $0x4a] sm:$0xff]
  %v343 = vld [vmem:[#allocation2 + $0x52] sm:$0xff]
  %v344 = vld [vmem:[#allocation2 + $0x62] sm:$0xff]
  %v345 = vld [vmem:[#allocation2 + $0x6a] sm:$0xff]
  %v346 = vld [vmem:[#allocation2 + $0x7a] sm:$0xff]
  %v347 = vld [vmem:[#allocation2 + $0x82] sm:$0xff]
  %v348 = vld [vmem:[#allocation2 + $0x92] sm:$0xff]
  %v349 = vld [vmem:[#allocation2 + $0x9a] sm:$0xff]
  %v350 = vld [vmem:[#allocation2 + $0xaa] sm:$0xff]
  %v351 = vld [vmem:[#allocation2 + $0xb2] sm:$0xff]
  %v352 = vld [vmem:[#allocation2 + $0xc2] sm:$0xff]
  %v353 = vld [vmem:[#allocation2 + $0xca] sm:$0xff]
  %v354 = vld [vmem:[#allocation2 + $0xda] sm:$0xff]
  %v355 = vld [vmem:[#allocation2 + $0xe2] sm:$0xff]
  %v356 = vld [vmem:[#allocation2 + $0xf2] sm:$0xff]
  %v357 = vld [vmem:[#allocation2 + $0xfa] sm:$0xff]
  %v358 = vld [vmem:[#allocation2 + $0x10a] sm:$0xff]
  %v359 = vld [vmem:[#allocation2 + $0x112] sm:$0xff]
  %v360 = vld [vmem:[#allocation2 + $0x122] sm:$0xff]
  %v361 = vld [vmem:[#allocation2 + $0x12a] sm:$0xff]
  %v362 = vld [vmem:[#allocation2 + $0x13a] sm:$0xff]
  %v363 = vld [vmem:[#allocation2 + $0x142] sm:$0xff]
  %v364 = vld [vmem:[#allocation2 + $0x152] sm:$0xff]
  %v365 = vld [vmem:[#allocation2 + $0x15a] sm:$0xff]
  %v366 = vld [vmem:[#allocation2 + $0x16a] sm:$0xff]
  %v367 = vld [vmem:[#allocation2 + $0x172] sm:$0xff]
  %s368 = sld [smem:[#allocation4 + $0x2]]
  %v369 = vstv %s368
  %v370 = vmul.f32 %v336, %v369
  %v371 = vmul.f32 %v337, %v369
  %v372 = vmul.f32 %v338, %v369
  %v373 = vmul.f32 %v339, %v369
  %v374 = vmul.f32 %v340, %v369
  %v375 = vmul.f32 %v341, %v369
  %v376 = vmul.f32 %v342, %v369
  %v377 = vmul.f32 %v343, %v369
  %v378 = vmul.f32 %v344, %v369
  %v379 = vmul.f32 %v345, %v369
  %v380 = vmul.f32 %v346, %v369
  %v381 = vmul.f32 %v347, %v369
  %v382 = vmul.f32 %v348, %v369
  %v383 = vmul.f32 %v349, %v369
  %v384 = vmul.f32 %v350, %v369
  %v385 = vmul.f32 %v351, %v369
  %v386 = vmul.f32 %v352, %v369
  %v387 = vmul.f32 %v353, %v369
  %v388 = vmul.f32 %v354, %v369
  %v389 = vmul.f32 %v355, %v369
  %v390 = vmul.f32 %v356, %v369
  %v391 = vmul.f32 %v357, %v369
  %v392 = vmul.f32 %v358, %v369
  %v393 = vmul.f32 %v359, %v369
  %v394 = vmul.f32 %v360, %v369
  %v395 = vmul.f32 %v361, %v369
  %v396 = vmul.f32 %v362, %v369
  %v397 = vmul.f32 %v363, %v369
  %v398 = vmul.f32 %v364, %v369
  %v399 = vmul.f32 %v365, %v369
  %v400 = vmul.f32 %v366, %v369
  %v401 = vmul.f32 %v367, %v369
  %v402 = vadd.f32 %v304, %v370
  %v403 = vadd.f32 %v305, %v371
  %v404 = vadd.f32 %v306, %v372
  %v405 = vadd.f32 %v307, %v373
  %v406 = vadd.f32 %v308, %v374
  %v407 = vadd.f32 %v309, %v375
  %v408 = vadd.f32 %v310, %v376
  %v409 = vadd.f32 %v311, %v377
  %v410 = vadd.f32 %v312, %v378
  %v411 = vadd.f32 %v313, %v379
  %v412 = vadd.f32 %v314, %v380
  %v413 = vadd.f32 %v315, %v381
  %v414 = vadd.f32 %v316, %v382
  %v415 = vadd.f32 %v317, %v383
  %v416 = vadd.f32 %v318, %v384
  %v417 = vadd.f32 %v319, %v385
  %v418 = vadd.f32 %v320, %v386
  %v419 = vadd.f32 %v321, %v387
  %v420 = vadd.f32 %v322, %v388
  %v421 = vadd.f32 %v323, %v389
  %v422 = vadd.f32 %v324, %v390
  %v423 = vadd.f32 %v325, %v391
  %v424 = vadd.f32 %v326, %v392
  %v425 = vadd.f32 %v327, %v393
  %v426 = vadd.f32 %v328, %v394
  %v427 = vadd.f32 %v329, %v395
  %v428 = vadd.f32 %v330, %v396
  %v429 = vadd.f32 %v331, %v397
  %v430 = vadd.f32 %v332, %v398
  %v431 = vadd.f32 %v333, %v399
  %v432 = vadd.f32 %v334, %v400
  %v433 = vadd.f32 %v335, %v401
  %v434 = vld [vmem:[%s105] sm:$0xff]
  %v435 = vld [vmem:[%s105 + $0x8] sm:$0xff]
  %v436 = vld [vmem:[%s105 + $0x18] sm:$0xff]
  %v437 = vld [vmem:[%s105 + $0x20] sm:$0xff]
  %v438 = vld [vmem:[%s105 + $0x30] sm:$0xff]
  %v439 = vld [vmem:[%s105 + $0x38] sm:$0xff]
  %v440 = vld [vmem:[%s105 + $0x48] sm:$0xff]
  %v441 = vld [vmem:[%s105 + $0x50] sm:$0xff]
  %v442 = vld [vmem:[%s105 + $0x60] sm:$0xff]
  %v443 = vld [vmem:[%s105 + $0x68] sm:$0xff]
  %v444 = vld [vmem:[%s105 + $0x78] sm:$0xff]
  %v445 = vld [vmem:[%s105 + $0x80] sm:$0xff]
  %v446 = vld [vmem:[%s105 + $0x90] sm:$0xff]
  %v447 = vld [vmem:[%s105 + $0x98] sm:$0xff]
  %v448 = vld [vmem:[%s105 + $0xa8] sm:$0xff]
  %v449 = vld [vmem:[%s105 + $0xb0] sm:$0xff]
  %v450 = vld [vmem:[%s105 + $0xc0] sm:$0xff]
  %v451 = vld [vmem:[%s105 + $0xc8] sm:$0xff]
  %v452 = vld [vmem:[%s105 + $0xd8] sm:$0xff]
  %v453 = vld [vmem:[%s105 + $0xe0] sm:$0xff]
  %v454 = vld [vmem:[%s105 + $0xf0] sm:$0xff]
  %v455 = vld [vmem:[%s105 + $0xf8] sm:$0xff]
  %v456 = vld [vmem:[%s105 + $0x108] sm:$0xff]
  %v457 = vld [vmem:[%s105 + $0x110] sm:$0xff]
  %v458 = vld [vmem:[%s105 + $0x120] sm:$0xff]
  %v459 = vld [vmem:[%s105 + $0x128] sm:$0xff]
  %v460 = vld [vmem:[%s105 + $0x138] sm:$0xff]
  %v461 = vld [vmem:[%s105 + $0x140] sm:$0xff]
  %v462 = vld [vmem:[%s105 + $0x150] sm:$0xff]
  %v463 = vld [vmem:[%s105 + $0x158] sm:$0xff]
  %v464 = vld [vmem:[%s105 + $0x168] sm:$0xff]
  %v465 = vld [vmem:[%s105 + $0x170] sm:$0xff]
  %s466 = sld [smem:[#allocation4 + $0x80]]
  %v467 = vstv %s466
  %v468 = vmul.f32 %v434, %v467
  %v469 = vmul.f32 %v435, %v467
  %v470 = vmul.f32 %v436, %v467
  %v471 = vmul.f32 %v437, %v467
  %v472 = vmul.f32 %v438, %v467
  %v473 = vmul.f32 %v439, %v467
  %v474 = vmul.f32 %v440, %v467
  %v475 = vmul.f32 %v441, %v467
  %v476 = vmul.f32 %v442, %v467
  %v477 = vmul.f32 %v443, %v467
  %v478 = vmul.f32 %v444, %v467
  %v479 = vmul.f32 %v445, %v467
  %v480 = vmul.f32 %v446, %v467
  %v481 = vmul.f32 %v447, %v467
  %v482 = vmul.f32 %v448, %v467
  %v483 = vmul.f32 %v449, %v467
  %v484 = vmul.f32 %v450, %v467
  %v485 = vmul.f32 %v451, %v467
  %v486 = vmul.f32 %v452, %v467
  %v487 = vmul.f32 %v453, %v467
  %v488 = vmul.f32 %v454, %v467
  %v489 = vmul.f32 %v455, %v467
  %v490 = vmul.f32 %v456, %v467
  %v491 = vmul.f32 %v457, %v467
  %v492 = vmul.f32 %v458, %v467
  %v493 = vmul.f32 %v459, %v467
  %v494 = vmul.f32 %v460, %v467
  %v495 = vmul.f32 %v461, %v467
  %v496 = vmul.f32 %v462, %v467
  %v497 = vmul.f32 %v463, %v467
  %v498 = vmul.f32 %v464, %v467
  %v499 = vmul.f32 %v465, %v467
  %v500 = vadd.f32 %v402, %v468
  %v501 = vadd.f32 %v403, %v469
  %v502 = vadd.f32 %v404, %v470
  %v503 = vadd.f32 %v405, %v471
  %v504 = vadd.f32 %v406, %v472
  %v505 = vadd.f32 %v407, %v473
  %v506 = vadd.f32 %v408, %v474
  %v507 = vadd.f32 %v409, %v475
  %v508 = vadd.f32 %v410, %v476
  %v509 = vadd.f32 %v411, %v477
  %v510 = vadd.f32 %v412, %v478
  %v511 = vadd.f32 %v413, %v479
  %v512 = vadd.f32 %v414, %v480
  %v513 = vadd.f32 %v415, %v481
  %v514 = vadd.f32 %v416, %v482
  %v515 = vadd.f32 %v417, %v483
  %v516 = vadd.f32 %v418, %v484
  %v517 = vadd.f32 %v419, %v485
  %v518 = vadd.f32 %v420, %v486
  %v519 = vadd.f32 %v421, %v487
  %v520 = vadd.f32 %v422, %v488
  %v521 = vadd.f32 %v423, %v489
  %v522 = vadd.f32 %v424, %v490
  %v523 = vadd.f32 %v425, %v491
  %v524 = vadd.f32 %v426, %v492
  %v525 = vadd.f32 %v427, %v493
  %v526 = vadd.f32 %v428, %v494
  %v527 = vadd.f32 %v429, %v495
  %v528 = vadd.f32 %v430, %v496
  %v529 = vadd.f32 %v431, %v497
  %v530 = vadd.f32 %v432, %v498
  %v531 = vadd.f32 %v433, %v499
  %v532 = vld [vmem:[%s105 + $0x1] sm:$0xff]
  %v533 = vld [vmem:[%s105 + $0x9] sm:$0xff]
  %v534 = vld [vmem:[%s105 + $0x19] sm:$0xff]
  %v535 = vld [vmem:[%s105 + $0x21] sm:$0xff]
  %v536 = vld [vmem:[%s105 + $0x31] sm:$0xff]
  %v537 = vld [vmem:[%s105 + $0x39] sm:$0xff]
  %v538 = vld [vmem:[%s105 + $0x49] sm:$0xff]
  %v539 = vld [vmem:[%s105 + $0x51] sm:$0xff]
  %v540 = vld [vmem:[%s105 + $0x61] sm:$0xff]
  %v541 = vld [vmem:[%s105 + $0x69] sm:$0xff]
  %v542 = vld [vmem:[%s105 + $0x79] sm:$0xff]
  %v543 = vld [vmem:[%s105 + $0x81] sm:$0xff]
  %v544 = vld [vmem:[%s105 + $0x91] sm:$0xff]
  %v545 = vld [vmem:[%s105 + $0x99] sm:$0xff]
  %v546 = vld [vmem:[%s105 + $0xa9] sm:$0xff]
  %v547 = vld [vmem:[%s105 + $0xb1] sm:$0xff]
  %v548 = vld [vmem:[%s105 + $0xc1] sm:$0xff]
  %v549 = vld [vmem:[%s105 + $0xc9] sm:$0xff]
  %v550 = vld [vmem:[%s105 + $0xd9] sm:$0xff]
  %v551 = vld [vmem:[%s105 + $0xe1] sm:$0xff]
  %v552 = vld [vmem:[%s105 + $0xf1] sm:$0xff]
  %v553 = vld [vmem:[%s105 + $0xf9] sm:$0xff]
  %v554 = vld [vmem:[%s105 + $0x109] sm:$0xff]
  %v555 = vld [vmem:[%s105 + $0x111] sm:$0xff]
  %v556 = vld [vmem:[%s105 + $0x121] sm:$0xff]
  %v557 = vld [vmem:[%s105 + $0x129] sm:$0xff]
  %v558 = vld [vmem:[%s105 + $0x139] sm:$0xff]
  %v559 = vld [vmem:[%s105 + $0x141] sm:$0xff]
  %v560 = vld [vmem:[%s105 + $0x151] sm:$0xff]
  %v561 = vld [vmem:[%s105 + $0x159] sm:$0xff]
  %v562 = vld [vmem:[%s105 + $0x169] sm:$0xff]
  %v563 = vld [vmem:[%s105 + $0x171] sm:$0xff]
  %s564 = sld [smem:[#allocation4 + $0x81]]
  %v565 = vstv %s564
  %v566 = vmul.f32 %v532, %v565
  %v567 = vmul.f32 %v533, %v565
  %v568 = vmul.f32 %v534, %v565
  %v569 = vmul.f32 %v535, %v565
  %v570 = vmul.f32 %v536, %v565
  %v571 = vmul.f32 %v537, %v565
  %v572 = vmul.f32 %v538, %v565
  %v573 = vmul.f32 %v539, %v565
  %v574 = vmul.f32 %v540, %v565
  %v575 = vmul.f32 %v541, %v565
  %v576 = vmul.f32 %v542, %v565
  %v577 = vmul.f32 %v543, %v565
  %v578 = vmul.f32 %v544, %v565
  %v579 = vmul.f32 %v545, %v565
  %v580 = vmul.f32 %v546, %v565
  %v581 = vmul.f32 %v547, %v565
  %v582 = vmul.f32 %v548, %v565
  %v583 = vmul.f32 %v549, %v565
  %v584 = vmul.f32 %v550, %v565
  %v585 = vmul.f32 %v551, %v565
  %v586 = vmul.f32 %v552, %v565
  %v587 = vmul.f32 %v553, %v565
  %v588 = vmul.f32 %v554, %v565
  %v589 = vmul.f32 %v555, %v565
  %v590 = vmul.f32 %v556, %v565
  %v591 = vmul.f32 %v557, %v565
  %v592 = vmul.f32 %v558, %v565
  %v593 = vmul.f32 %v559, %v565
  %v594 = vmul.f32 %v560, %v565
  %v595 = vmul.f32 %v561, %v565
  %v596 = vmul.f32 %v562, %v565
  %v597 = vmul.f32 %v563, %v565
  %v598 = vadd.f32 %v500, %v566
  %v599 = vadd.f32 %v501, %v567
  %v600 = vadd.f32 %v502, %v568
  %v601 = vadd.f32 %v503, %v569
  %v602 = vadd.f32 %v504, %v570
  %v603 = vadd.f32 %v505, %v571
  %v604 = vadd.f32 %v506, %v572
  %v605 = vadd.f32 %v507, %v573
  %v606 = vadd.f32 %v508, %v574
  %v607 = vadd.f32 %v509, %v575
  %v608 = vadd.f32 %v510, %v576
  %v609 = vadd.f32 %v511, %v577
  %v610 = vadd.f32 %v512, %v578
  %v611 = vadd.f32 %v513, %v579
  %v612 = vadd.f32 %v514, %v580
  %v613 = vadd.f32 %v515, %v581
  %v614 = vadd.f32 %v516, %v582
  %v615 = vadd.f32 %v517, %v583
  %v616 = vadd.f32 %v518, %v584
  %v617 = vadd.f32 %v519, %v585
  %v618 = vadd.f32 %v520, %v586
  %v619 = vadd.f32 %v521, %v587
  %v620 = vadd.f32 %v522, %v588
  %v621 = vadd.f32 %v523, %v589
  %v622 = vadd.f32 %v524, %v590
  %v623 = vadd.f32 %v525, %v591
  %v624 = vadd.f32 %v526, %v592
  %v625 = vadd.f32 %v527, %v593
  %v626 = vadd.f32 %v528, %v594
  %v627 = vadd.f32 %v529, %v595
  %v628 = vadd.f32 %v530, %v596
  %v629 = vadd.f32 %v531, %v597
  %v630 = vld [vmem:[%s105 + $0x2] sm:$0xff]
  %v631 = vld [vmem:[%s105 + $0xa] sm:$0xff]
  %v632 = vld [vmem:[%s105 + $0x1a] sm:$0xff]
  %v633 = vld [vmem:[%s105 + $0x22] sm:$0xff]
  %v634 = vld [vmem:[%s105 + $0x32] sm:$0xff]
  %v635 = vld [vmem:[%s105 + $0x3a] sm:$0xff]
  %v636 = vld [vmem:[%s105 + $0x4a] sm:$0xff]
  %v637 = vld [vmem:[%s105 + $0x52] sm:$0xff]
  %v638 = vld [vmem:[%s105 + $0x62] sm:$0xff]
  %v639 = vld [vmem:[%s105 + $0x6a] sm:$0xff]
  %v640 = vld [vmem:[%s105 + $0x7a] sm:$0xff]
  %v641 = vld [vmem:[%s105 + $0x82] sm:$0xff]
  %v642 = vld [vmem:[%s105 + $0x92] sm:$0xff]
  %v643 = vld [vmem:[%s105 + $0x9a] sm:$0xff]
  %v644 = vld [vmem:[%s105 + $0xaa] sm:$0xff]
  %v645 = vld [vmem:[%s105 + $0xb2] sm:$0xff]
  %v646 = vld [vmem:[%s105 + $0xc2] sm:$0xff]
  %v647 = vld [vmem:[%s105 + $0xca] sm:$0xff]
  %v648 = vld [vmem:[%s105 + $0xda] sm:$0xff]
  %v649 = vld [vmem:[%s105 + $0xe2] sm:$0xff]
  %v650 = vld [vmem:[%s105 + $0xf2] sm:$0xff]
  %v651 = vld [vmem:[%s105 + $0xfa] sm:$0xff]
  %v652 = vld [vmem:[%s105 + $0x10a] sm:$0xff]
  %v653 = vld [vmem:[%s105 + $0x112] sm:$0xff]
  %v654 = vld [vmem:[%s105 + $0x122] sm:$0xff]
  %v655 = vld [vmem:[%s105 + $0x12a] sm:$0xff]
  %v656 = vld [vmem:[%s105 + $0x13a] sm:$0xff]
  %v657 = vld [vmem:[%s105 + $0x142] sm:$0xff]
  %v658 = vld [vmem:[%s105 + $0x152] sm:$0xff]
  %v659 = vld [vmem:[%s105 + $0x15a] sm:$0xff]
  %v660 = vld [vmem:[%s105 + $0x16a] sm:$0xff]
  %v661 = vld [vmem:[%s105 + $0x172] sm:$0xff]
  %s662 = sld [smem:[#allocation4 + $0x82]]
  %v663 = vstv %s662
  %v664 = vmul.f32 %v630, %v663
  %v665 = vmul.f32 %v631, %v663
  %v666 = vmul.f32 %v632, %v663
  %v667 = vmul.f32 %v633, %v663
  %v668 = vmul.f32 %v634, %v663
  %v669 = vmul.f32 %v635, %v663
  %v670 = vmul.f32 %v636, %v663
  %v671 = vmul.f32 %v637, %v663
  %v672 = vmul.f32 %v638, %v663
  %v673 = vmul.f32 %v639, %v663
  %v674 = vmul.f32 %v640, %v663
  %v675 = vmul.f32 %v641, %v663
  %v676 = vmul.f32 %v642, %v663
  %v677 = vmul.f32 %v643, %v663
  %v678 = vmul.f32 %v644, %v663
  %v679 = vmul.f32 %v645, %v663
  %v680 = vmul.f32 %v646, %v663
  %v681 = vmul.f32 %v647, %v663
  %v682 = vmul.f32 %v648, %v663
  %v683 = vmul.f32 %v649, %v663
  %v684 = vmul.f32 %v650, %v663
  %v685 = vmul.f32 %v651, %v663
  %v686 = vmul.f32 %v652, %v663
  %v687 = vmul.f32 %v653, %v663
  %v688 = vmul.f32 %v654, %v663
  %v689 = vmul.f32 %v655, %v663
  %v690 = vmul.f32 %v656, %v663
  %v691 = vmul.f32 %v657, %v663
  %v692 = vmul.f32 %v658, %v663
  %v693 = vmul.f32 %v659, %v663
  %v694 = vmul.f32 %v660, %v663
  %v695 = vmul.f32 %v661, %v663
  %v696 = vadd.f32 %v598, %v664
  %v697 = vadd.f32 %v599, %v665
  %v698 = vadd.f32 %v600, %v666
  %v699 = vadd.f32 %v601, %v667
  %v700 = vadd.f32 %v602, %v668
  %v701 = vadd.f32 %v603, %v669
  %v702 = vadd.f32 %v604, %v670
  %v703 = vadd.f32 %v605, %v671
  %v704 = vadd.f32 %v606, %v672
  %v705 = vadd.f32 %v607, %v673
  %v706 = vadd.f32 %v608, %v674
  %v707 = vadd.f32 %v609, %v675
  %v708 = vadd.f32 %v610, %v676
  %v709 = vadd.f32 %v611, %v677
  %v710 = vadd.f32 %v612, %v678
  %v711 = vadd.f32 %v613, %v679
  %v712 = vadd.f32 %v614, %v680
  %v713 = vadd.f32 %v615, %v681
  %v714 = vadd.f32 %v616, %v682
  %v715 = vadd.f32 %v617, %v683
  %v716 = vadd.f32 %v618, %v684
  %v717 = vadd.f32 %v619, %v685
  %v718 = vadd.f32 %v620, %v686
  %v719 = vadd.f32 %v621, %v687
  %v720 = vadd.f32 %v622, %v688
  %v721 = vadd.f32 %v623, %v689
  %v722 = vadd.f32 %v624, %v690
  %v723 = vadd.f32 %v625, %v691
  %v724 = vadd.f32 %v626, %v692
  %v725 = vadd.f32 %v627, %v693
  %v726 = vadd.f32 %v628, %v694
  %v727 = vadd.f32 %v629, %v695
  %s728 = scalar_lea.vmem [#allocation2], 48
  %v729 = vld [vmem:[%s728] sm:$0xff]
  %v730 = vld [vmem:[%s728 + $0x8] sm:$0xff]
  %v731 = vld [vmem:[%s728 + $0x18] sm:$0xff]
  %v732 = vld [vmem:[%s728 + $0x20] sm:$0xff]
  %v733 = vld [vmem:[%s728 + $0x30] sm:$0xff]
  %v734 = vld [vmem:[%s728 + $0x38] sm:$0xff]
  %v735 = vld [vmem:[%s728 + $0x48] sm:$0xff]
  %v736 = vld [vmem:[%s728 + $0x50] sm:$0xff]
  %v737 = vld [vmem:[%s728 + $0x60] sm:$0xff]
  %v738 = vld [vmem:[%s728 + $0x68] sm:$0xff]
  %v739 = vld [vmem:[%s728 + $0x78] sm:$0xff]
  %v740 = vld [vmem:[%s728 + $0x80] sm:$0xff]
  %v741 = vld [vmem:[%s728 + $0x90] sm:$0xff]
  %v742 = vld [vmem:[%s728 + $0x98] sm:$0xff]
  %v743 = vld [vmem:[%s728 + $0xa8] sm:$0xff]
  %v744 = vld [vmem:[%s728 + $0xb0] sm:$0xff]
  %v745 = vld [vmem:[%s728 + $0xc0] sm:$0xff]
  %v746 = vld [vmem:[%s728 + $0xc8] sm:$0xff]
  %v747 = vld [vmem:[%s728 + $0xd8] sm:$0xff]
  %v748 = vld [vmem:[%s728 + $0xe0] sm:$0xff]
  %v749 = vld [vmem:[%s728 + $0xf0] sm:$0xff]
  %v750 = vld [vmem:[%s728 + $0xf8] sm:$0xff]
  %v751 = vld [vmem:[%s728 + $0x108] sm:$0xff]
  %v752 = vld [vmem:[%s728 + $0x110] sm:$0xff]
  %v753 = vld [vmem:[%s728 + $0x120] sm:$0xff]
  %v754 = vld [vmem:[%s728 + $0x128] sm:$0xff]
  %v755 = vld [vmem:[%s728 + $0x138] sm:$0xff]
  %v756 = vld [vmem:[%s728 + $0x140] sm:$0xff]
  %v757 = vld [vmem:[%s728 + $0x150] sm:$0xff]
  %v758 = vld [vmem:[%s728 + $0x158] sm:$0xff]
  %v759 = vld [vmem:[%s728 + $0x168] sm:$0xff]
  %v760 = vld [vmem:[%s728 + $0x170] sm:$0xff]
  %s761 = sld [smem:[#allocation4 + $0x100]]
  %v762 = vstv %s761
  %v763 = vmul.f32 %v729, %v762
  %v764 = vmul.f32 %v730, %v762
  %v765 = vmul.f32 %v731, %v762
  %v766 = vmul.f32 %v732, %v762
  %v767 = vmul.f32 %v733, %v762
  %v768 = vmul.f32 %v734, %v762
  %v769 = vmul.f32 %v735, %v762
  %v770 = vmul.f32 %v736, %v762
  %v771 = vmul.f32 %v737, %v762
  %v772 = vmul.f32 %v738, %v762
  %v773 = vmul.f32 %v739, %v762
  %v774 = vmul.f32 %v740, %v762
  %v775 = vmul.f32 %v741, %v762
  %v776 = vmul.f32 %v742, %v762
  %v777 = vmul.f32 %v743, %v762
  %v778 = vmul.f32 %v744, %v762
  %v779 = vmul.f32 %v745, %v762
  %v780 = vmul.f32 %v746, %v762
  %v781 = vmul.f32 %v747, %v762
  %v782 = vmul.f32 %v748, %v762
  %v783 = vmul.f32 %v749, %v762
  %v784 = vmul.f32 %v750, %v762
  %v785 = vmul.f32 %v751, %v762
  %v786 = vmul.f32 %v752, %v762
  %v787 = vmul.f32 %v753, %v762
  %v788 = vmul.f32 %v754, %v762
  %v789 = vmul.f32 %v755, %v762
  %v790 = vmul.f32 %v756, %v762
  %v791 = vmul.f32 %v757, %v762
  %v792 = vmul.f32 %v758, %v762
  %v793 = vmul.f32 %v759, %v762
  %v794 = vmul.f32 %v760, %v762
  %v795 = vadd.f32 %v696, %v763
  %v796 = vadd.f32 %v697, %v764
  %v797 = vadd.f32 %v698, %v765
  %v798 = vadd.f32 %v699, %v766
  %v799 = vadd.f32 %v700, %v767
  %v800 = vadd.f32 %v701, %v768
  %v801 = vadd.f32 %v702, %v769
  %v802 = vadd.f32 %v703, %v770
  %v803 = vadd.f32 %v704, %v771
  %v804 = vadd.f32 %v705, %v772
  %v805 = vadd.f32 %v706, %v773
  %v806 = vadd.f32 %v707, %v774
  %v807 = vadd.f32 %v708, %v775
  %v808 = vadd.f32 %v709, %v776
  %v809 = vadd.f32 %v710, %v777
  %v810 = vadd.f32 %v711, %v778
  %v811 = vadd.f32 %v712, %v779
  %v812 = vadd.f32 %v713, %v780
  %v813 = vadd.f32 %v714, %v781
  %v814 = vadd.f32 %v715, %v782
  %v815 = vadd.f32 %v716, %v783
  %v816 = vadd.f32 %v717, %v784
  %v817 = vadd.f32 %v718, %v785
  %v818 = vadd.f32 %v719, %v786
  %v819 = vadd.f32 %v720, %v787
  %v820 = vadd.f32 %v721, %v788
  %v821 = vadd.f32 %v722, %v789
  %v822 = vadd.f32 %v723, %v790
  %v823 = vadd.f32 %v724, %v791
  %v824 = vadd.f32 %v725, %v792
  %v825 = vadd.f32 %v726, %v793
  %v826 = vadd.f32 %v727, %v794
  %v827 = vld [vmem:[%s728 + $0x1] sm:$0xff]
  %v828 = vld [vmem:[%s728 + $0x9] sm:$0xff]
  %v829 = vld [vmem:[%s728 + $0x19] sm:$0xff]
  %v830 = vld [vmem:[%s728 + $0x21] sm:$0xff]
  %v831 = vld [vmem:[%s728 + $0x31] sm:$0xff]
  %v832 = vld [vmem:[%s728 + $0x39] sm:$0xff]
  %v833 = vld [vmem:[%s728 + $0x49] sm:$0xff]
  %v834 = vld [vmem:[%s728 + $0x51] sm:$0xff]
  %v835 = vld [vmem:[%s728 + $0x61] sm:$0xff]
  %v836 = vld [vmem:[%s728 + $0x69] sm:$0xff]
  %v837 = vld [vmem:[%s728 + $0x79] sm:$0xff]
  %v838 = vld [vmem:[%s728 + $0x81] sm:$0xff]
  %v839 = vld [vmem:[%s728 + $0x91] sm:$0xff]
  %v840 = vld [vmem:[%s728 + $0x99] sm:$0xff]
  %v841 = vld [vmem:[%s728 + $0xa9] sm:$0xff]
  %v842 = vld [vmem:[%s728 + $0xb1] sm:$0xff]
  %v843 = vld [vmem:[%s728 + $0xc1] sm:$0xff]
  %v844 = vld [vmem:[%s728 + $0xc9] sm:$0xff]
  %v845 = vld [vmem:[%s728 + $0xd9] sm:$0xff]
  %v846 = vld [vmem:[%s728 + $0xe1] sm:$0xff]
  %v847 = vld [vmem:[%s728 + $0xf1] sm:$0xff]
  %v848 = vld [vmem:[%s728 + $0xf9] sm:$0xff]
  %v849 = vld [vmem:[%s728 + $0x109] sm:$0xff]
  %v850 = vld [vmem:[%s728 + $0x111] sm:$0xff]
  %v851 = vld [vmem:[%s728 + $0x121] sm:$0xff]
  %v852 = vld [vmem:[%s728 + $0x129] sm:$0xff]
  %v853 = vld [vmem:[%s728 + $0x139] sm:$0xff]
  %v854 = vld [vmem:[%s728 + $0x141] sm:$0xff]
  %v855 = vld [vmem:[%s728 + $0x151] sm:$0xff]
  %v856 = vld [vmem:[%s728 + $0x159] sm:$0xff]
  %v857 = vld [vmem:[%s728 + $0x169] sm:$0xff]
  %v858 = vld [vmem:[%s728 + $0x171] sm:$0xff]
  %s859 = sld [smem:[#allocation4 + $0x101]]
  %v860 = vstv %s859
  %v861 = vmul.f32 %v827, %v860
  %v862 = vmul.f32 %v828, %v860
  %v863 = vmul.f32 %v829, %v860
  %v864 = vmul.f32 %v830, %v860
  %v865 = vmul.f32 %v831, %v860
  %v866 = vmul.f32 %v832, %v860
  %v867 = vmul.f32 %v833, %v860
  %v868 = vmul.f32 %v834, %v860
  %v869 = vmul.f32 %v835, %v860
  %v870 = vmul.f32 %v836, %v860
  %v871 = vmul.f32 %v837, %v860
  %v872 = vmul.f32 %v838, %v860
  %v873 = vmul.f32 %v839, %v860
  %v874 = vmul.f32 %v840, %v860
  %v875 = vmul.f32 %v841, %v860
  %v876 = vmul.f32 %v842, %v860
  %v877 = vmul.f32 %v843, %v860
  %v878 = vmul.f32 %v844, %v860
  %v879 = vmul.f32 %v845, %v860
  %v880 = vmul.f32 %v846, %v860
  %v881 = vmul.f32 %v847, %v860
  %v882 = vmul.f32 %v848, %v860
  %v883 = vmul.f32 %v849, %v860
  %v884 = vmul.f32 %v850, %v860
  %v885 = vmul.f32 %v851, %v860
  %v886 = vmul.f32 %v852, %v860
  %v887 = vmul.f32 %v853, %v860
  %v888 = vmul.f32 %v854, %v860
  %v889 = vmul.f32 %v855, %v860
  %v890 = vmul.f32 %v856, %v860
  %v891 = vmul.f32 %v857, %v860
  %v892 = vmul.f32 %v858, %v860
  %v893 = vadd.f32 %v795, %v861
  %v894 = vadd.f32 %v796, %v862
  %v895 = vadd.f32 %v797, %v863
  %v896 = vadd.f32 %v798, %v864
  %v897 = vadd.f32 %v799, %v865
  %v898 = vadd.f32 %v800, %v866
  %v899 = vadd.f32 %v801, %v867
  %v900 = vadd.f32 %v802, %v868
  %v901 = vadd.f32 %v803, %v869
  %v902 = vadd.f32 %v804, %v870
  %v903 = vadd.f32 %v805, %v871
  %v904 = vadd.f32 %v806, %v872
  %v905 = vadd.f32 %v807, %v873
  %v906 = vadd.f32 %v808, %v874
  %v907 = vadd.f32 %v809, %v875
  %v908 = vadd.f32 %v810, %v876
  %v909 = vadd.f32 %v811, %v877
  %v910 = vadd.f32 %v812, %v878
  %v911 = vadd.f32 %v813, %v879
  %v912 = vadd.f32 %v814, %v880
  %v913 = vadd.f32 %v815, %v881
  %v914 = vadd.f32 %v816, %v882
  %v915 = vadd.f32 %v817, %v883
  %v916 = vadd.f32 %v818, %v884
  %v917 = vadd.f32 %v819, %v885
  %v918 = vadd.f32 %v820, %v886
  %v919 = vadd.f32 %v821, %v887
  %v920 = vadd.f32 %v822, %v888
  %v921 = vadd.f32 %v823, %v889
  %v922 = vadd.f32 %v824, %v890
  %v923 = vadd.f32 %v825, %v891
  %v924 = vadd.f32 %v826, %v892
  %v925 = vld [vmem:[%s728 + $0x2] sm:$0xff]
  %v926 = vld [vmem:[%s728 + $0xa] sm:$0xff]
  %v927 = vld [vmem:[%s728 + $0x1a] sm:$0xff]
  %v928 = vld [vmem:[%s728 + $0x22] sm:$0xff]
  %v929 = vld [vmem:[%s728 + $0x32] sm:$0xff]
  %v930 = vld [vmem:[%s728 + $0x3a] sm:$0xff]
  %v931 = vld [vmem:[%s728 + $0x4a] sm:$0xff]
  %v932 = vld [vmem:[%s728 + $0x52] sm:$0xff]
  %v933 = vld [vmem:[%s728 + $0x62] sm:$0xff]
  %v934 = vld [vmem:[%s728 + $0x6a] sm:$0xff]
  %v935 = vld [vmem:[%s728 + $0x7a] sm:$0xff]
  %v936 = vld [vmem:[%s728 + $0x82] sm:$0xff]
  %v937 = vld [vmem:[%s728 + $0x92] sm:$0xff]
  %v938 = vld [vmem:[%s728 + $0x9a] sm:$0xff]
  %v939 = vld [vmem:[%s728 + $0xaa] sm:$0xff]
  %v940 = vld [vmem:[%s728 + $0xb2] sm:$0xff]
  %v941 = vld [vmem:[%s728 + $0xc2] sm:$0xff]
  %v942 = vld [vmem:[%s728 + $0xca] sm:$0xff]
  %v943 = vld [vmem:[%s728 + $0xda] sm:$0xff]
  %v944 = vld [vmem:[%s728 + $0xe2] sm:$0xff]
  %v945 = vld [vmem:[%s728 + $0xf2] sm:$0xff]
  %v946 = vld [vmem:[%s728 + $0xfa] sm:$0xff]
  %v947 = vld [vmem:[%s728 + $0x10a] sm:$0xff]
  %v948 = vld [vmem:[%s728 + $0x112] sm:$0xff]
  %v949 = vld [vmem:[%s728 + $0x122] sm:$0xff]
  %v950 = vld [vmem:[%s728 + $0x12a] sm:$0xff]
  %v951 = vld [vmem:[%s728 + $0x13a] sm:$0xff]
  %v952 = vld [vmem:[%s728 + $0x142] sm:$0xff]
  %v953 = vld [vmem:[%s728 + $0x152] sm:$0xff]
  %v954 = vld [vmem:[%s728 + $0x15a] sm:$0xff]
  %v955 = vld [vmem:[%s728 + $0x16a] sm:$0xff]
  %v956 = vld [vmem:[%s728 + $0x172] sm:$0xff]
  %s957 = sld [smem:[#allocation4 + $0x102]]
  %v958 = vstv %s957
  %v959 = vmul.f32 %v925, %v958
  %v960 = vmul.f32 %v926, %v958
  %v961 = vmul.f32 %v927, %v958
  %v962 = vmul.f32 %v928, %v958
  %v963 = vmul.f32 %v929, %v958
  %v964 = vmul.f32 %v930, %v958
  %v965 = vmul.f32 %v931, %v958
  %v966 = vmul.f32 %v932, %v958
  %v967 = vmul.f32 %v933, %v958
  %v968 = vmul.f32 %v934, %v958
  %v969 = vmul.f32 %v935, %v958
  %v970 = vmul.f32 %v936, %v958
  %v971 = vmul.f32 %v937, %v958
  %v972 = vmul.f32 %v938, %v958
  %v973 = vmul.f32 %v939, %v958
  %v974 = vmul.f32 %v940, %v958
  %v975 = vmul.f32 %v941, %v958
  %v976 = vmul.f32 %v942, %v958
  %v977 = vmul.f32 %v943, %v958
  %v978 = vmul.f32 %v944, %v958
  %v979 = vmul.f32 %v945, %v958
  %v980 = vmul.f32 %v946, %v958
  %v981 = vmul.f32 %v947, %v958
  %v982 = vmul.f32 %v948, %v958
  %v983 = vmul.f32 %v949, %v958
  %v984 = vmul.f32 %v950, %v958
  %v985 = vmul.f32 %v951, %v958
  %v986 = vmul.f32 %v952, %v958
  %v987 = vmul.f32 %v953, %v958
  %v988 = vmul.f32 %v954, %v958
  %v989 = vmul.f32 %v955, %v958
  %v990 = vmul.f32 %v956, %v958
  %v991 = vadd.f32 %v893, %v959
  %v992 = vadd.f32 %v894, %v960
  %v993 = vadd.f32 %v895, %v961
  %v994 = vadd.f32 %v896, %v962
  %v995 = vadd.f32 %v897, %v963
  %v996 = vadd.f32 %v898, %v964
  %v997 = vadd.f32 %v899, %v965
  %v998 = vadd.f32 %v900, %v966
  %v999 = vadd.f32 %v901, %v967
  %v1000 = vadd.f32 %v902, %v968
  %v1001 = vadd.f32 %v903, %v969
  %v1002 = vadd.f32 %v904, %v970
  %v1003 = vadd.f32 %v905, %v971
  %v1004 = vadd.f32 %v906, %v972
  %v1005 = vadd.f32 %v907, %v973
  %v1006 = vadd.f32 %v908, %v974
  %v1007 = vadd.f32 %v909, %v975
  %v1008 = vadd.f32 %v910, %v976
  %v1009 = vadd.f32 %v911, %v977
  %v1010 = vadd.f32 %v912, %v978
  %v1011 = vadd.f32 %v913, %v979
  %v1012 = vadd.f32 %v914, %v980
  %v1013 = vadd.f32 %v915, %v981
  %v1014 = vadd.f32 %v916, %v982
  %v1015 = vadd.f32 %v917, %v983
  %v1016 = vadd.f32 %v918, %v984
  %v1017 = vadd.f32 %v919, %v985
  %v1018 = vadd.f32 %v920, %v986
  %v1019 = vadd.f32 %v921, %v987
  %v1020 = vadd.f32 %v922, %v988
  %v1021 = vadd.f32 %v923, %v989
  %v1022 = vadd.f32 %v924, %v990
  %1023 = vst.msk [vmem:[%s3] sm:$0xff] %vm17, %v991
  %1024 = vst.msk [vmem:[%s3 + $0x8] sm:$0xff] %vm17, %v992
  %1025 = vst.msk [vmem:[%s3 + $0x10] sm:$0xff] %vm17, %v993
  %1026 = vst.msk [vmem:[%s3 + $0x18] sm:$0xff] %vm17, %v994
  %1027 = vst.msk [vmem:[%s3 + $0x20] sm:$0xff] %vm17, %v995
  %1028 = vst.msk [vmem:[%s3 + $0x28] sm:$0xff] %vm17, %v996
  %1029 = vst.msk [vmem:[%s3 + $0x30] sm:$0xff] %vm17, %v997
  %1030 = vst.msk [vmem:[%s3 + $0x38] sm:$0xff] %vm17, %v998
  %1031 = vst.msk [vmem:[%s3 + $0x40] sm:$0xff] %vm17, %v999
  %1032 = vst.msk [vmem:[%s3 + $0x48] sm:$0xff] %vm17, %v1000
  %1033 = vst.msk [vmem:[%s3 + $0x50] sm:$0xff] %vm17, %v1001
  %1034 = vst.msk [vmem:[%s3 + $0x58] sm:$0xff] %vm17, %v1002
  %1035 = vst.msk [vmem:[%s3 + $0x60] sm:$0xff] %vm17, %v1003
  %1036 = vst.msk [vmem:[%s3 + $0x68] sm:$0xff] %vm17, %v1004
  %1037 = vst.msk [vmem:[%s3 + $0x70] sm:$0xff] %vm17, %v1005
  %1038 = vst.msk [vmem:[%s3 + $0x78] sm:$0xff] %vm17, %v1006
  %1039 = vst.msk [vmem:[%s3 + $0x80] sm:$0xff] %vm17, %v1007
  %1040 = vst.msk [vmem:[%s3 + $0x88] sm:$0xff] %vm17, %v1008
  %1041 = vst.msk [vmem:[%s3 + $0x90] sm:$0xff] %vm17, %v1009
  %1042 = vst.msk [vmem:[%s3 + $0x98] sm:$0xff] %vm17, %v1010
  %1043 = vst.msk [vmem:[%s3 + $0xa0] sm:$0xff] %vm17, %v1011
  %1044 = vst.msk [vmem:[%s3 + $0xa8] sm:$0xff] %vm17, %v1012
  %1045 = vst.msk [vmem:[%s3 + $0xb0] sm:$0xff] %vm17, %v1013
  %1046 = vst.msk [vmem:[%s3 + $0xb8] sm:$0xff] %vm17, %v1014
  %1047 = vst.msk [vmem:[%s3 + $0xc0] sm:$0xff] %vm17, %v1015
  %1048 = vst.msk [vmem:[%s3 + $0xc8] sm:$0xff] %vm17, %v1016
  %1049 = vst.msk [vmem:[%s3 + $0xd0] sm:$0xff] %vm17, %v1017
  %1050 = vst.msk [vmem:[%s3 + $0xd8] sm:$0xff] %vm17, %v1018
  %1051 = vst.msk [vmem:[%s3 + $0xe0] sm:$0xff] %vm17, %v1019
  %1052 = vst.msk [vmem:[%s3 + $0xe8] sm:$0xff] %vm17, %v1020
  %1053 = vst.msk [vmem:[%s3 + $0xf0] sm:$0xff] %vm17, %v1021
  %1054 = vst.msk [vmem:[%s3 + $0xf8] sm:$0xff] %vm17, %v1022
  // Predicated region
  $region6: #{fixed_conv.1} parent=0 // pred_check
    _
  $region7: #{fixed_conv.1} parent=0 // pred_check_branch
    %1056 = sbr.rel (0) target = $region9
  $region8: #{fixed_conv.1} parent=0 // pred_region
    _
  $region9: #{fixed_conv.1} parent=0 // pred_fallthru
    _
  // Predicated region
  $region10: #{fixed_conv.1} parent=0 // pred_check
    _
  $region11: #{fixed_conv.1} parent=0 // pred_check_branch
    %1058 = sbr.rel (0) target = $region13
  $region12: #{fixed_conv.1} parent=0 // pred_region
    _
  $region13: #{fixed_conv.1} parent=0 // pred_fallthru
    _

</llo_original>
